<compile_context>
chip_gen: v5e
topology: v5e:2x2
jax: 0.10.0
libtpu: 0.0.40
codegen_flags: <defaults>
</compile_context>

<pallas_src>
import jax
import jax.numpy as jnp
from jax.experimental import pallas as pl
from jax.experimental.pallas import tpu as pltpu


LANE = 128  # TPU lane width


def _round_up(x: int, m: int) -> int:
    return (x + m - 1) // m * m


# --------------------------------------------------------------------------
# Kernel
# --------------------------------------------------------------------------
def _actor_kernel(ub_ref,                      # (1,1) f32 in SMEM
                  x_ref,                       # (bb, S)   f32
                  w1_ref, b1_ref,              # (S, H1) bf16 / (1, H1) f32
                  w2_ref, b2_ref,              # (H1,H2) bf16 / (1, H2) f32
                  w3_ref, b3_ref,              # (H2,H3p) bf16 / (1, H3p) f32
                  w4_ref, b4_ref,              # (H3p,Ap) bf16 / (1, Ap) f32
                  out_ref):                    # (bb, Ap) f32
    """Fused 4-layer MLP: bf16 MXU matmuls, f32 accumulation + elementwise."""
    ub = ub_ref[0, 0]

    x = x_ref[...].astype(jnp.bfloat16)

    h = jnp.dot(x, w1_ref[...], preferred_element_type=jnp.float32) + b1_ref[...]
    h = jnp.maximum(h, 0.0)

    h = jnp.dot(h.astype(jnp.bfloat16), w2_ref[...],
                preferred_element_type=jnp.float32) + b2_ref[...]
    h = jnp.maximum(h, 0.0)

    h = jnp.dot(h.astype(jnp.bfloat16), w3_ref[...],
                preferred_element_type=jnp.float32) + b3_ref[...]
    h = jnp.maximum(h, 0.0)

    h = jnp.dot(h.astype(jnp.bfloat16), w4_ref[...],
                preferred_element_type=jnp.float32) + b4_ref[...]

    out_ref[...] = jnp.tanh(h) * ub   # padded action lanes are tanh(0)*ub = 0


# --------------------------------------------------------------------------
# Parameter init (mirrors DDPGActor.reset_parameters) + kernel-side prep
# --------------------------------------------------------------------------
def init_ddpg_actor_params(key, state_size, action_size,
                           hidden_units=(256, 128, 64)):
    """Deterministic f32 init mirroring DDPGActor.reset_parameters().

    PyTorch's hidden_init uses weight.size(0) (== out_features) as fan_in;
    we reproduce that exactly. Biases use the default nn.Linear init range
    (+-1/sqrt(in_features)).
    """
    h1, h2, h3 = hidden_units
    dims = [(state_size, h1), (h1, h2), (h2, h3), (h3, action_size)]
    keys = jax.random.split(key, 8)
    params = {}
    for i, (din, dout) in enumerate(dims, start=1):
        if i < 4:
            lim_w = 1.0 / jnp.sqrt(jnp.float32(dout))  # matches hidden_init bug
        else:
            lim_w = 0.003
        lim_b = 1.0 / jnp.sqrt(jnp.float32(din))
        params[f"w{i}"] = jax.random.uniform(
            keys[2 * (i - 1)], (din, dout), jnp.float32, -lim_w, lim_w)
        params[f"b{i}"] = jax.random.uniform(
            keys[2 * (i - 1) + 1], (1, dout), jnp.float32, -lim_b, lim_b)
    return params


def prepare_params_for_kernel(params):
    """Zero-pad <128 lane dims to 128 and cast weights to bf16 (biases stay f32).

    Zero padding is numerically exact: padded hidden lanes are relu(0)=0 and
    their w4 rows are 0, so they contribute nothing; padded action lanes are
    sliced off by the wrapper.
    """
    h3 = params["w3"].shape[1]
    a = params["w4"].shape[1]
    h3p = _round_up(h3, LANE)
    ap = _round_up(a, LANE)

    w1 = params["w1"].astype(jnp.bfloat16)
    b1 = params["b1"].astype(jnp.float32)
    w2 = params["w2"].astype(jnp.bfloat16)
    b2 = params["b2"].astype(jnp.float32)

    w3 = jnp.pad(params["w3"], ((0, 0), (0, h3p - h3))).astype(jnp.bfloat16)
    b3 = jnp.pad(params["b3"], ((0, 0), (0, h3p - h3))).astype(jnp.float32)

    w4 = jnp.pad(params["w4"], ((0, h3p - h3), (0, ap - a))).astype(jnp.bfloat16)
    b4 = jnp.pad(params["b4"], ((0, 0), (0, ap - a))).astype(jnp.float32)

    return {"w1": w1, "b1": b1, "w2": w2, "b2": b2,
            "w3": w3, "b3": b3, "w4": w4, "b4": b4,
            "action_size": a}


# --------------------------------------------------------------------------
# Wrapper
# --------------------------------------------------------------------------
def ddpg_actor_forward(state, kparams, upper_bound=1.0, *, block_b=256):
    """state: (B, state_size) f32. kparams: output of prepare_params_for_kernel."""
    B, S = state.shape
    action_size = kparams["action_size"]
    a_pad = kparams["b4"].shape[1]

    # Batch tile: up to `block_b` rows per grid step (sublane-aligned).
    bb = min(block_b, _round_up(B, 8))
    Bp = _round_up(B, bb)

    x = state.astype(jnp.float32)
    if Bp != B:
        x = jnp.pad(x, ((0, Bp - B), (0, 0)))

    ub = jnp.full((1, 1), upper_bound, dtype=jnp.float32)

    weight_args = (
        kparams["w1"], kparams["b1"],
        kparams["w2"], kparams["b2"],
        kparams["w3"], kparams["b3"],
        kparams["w4"], kparams["b4"],
    )

    # upper_bound lives in SMEM; weights use a constant index_map so they stay
    # VMEM-resident across batch tiles; x / out are tiled along the batch axis.
    smem_spec = pl.BlockSpec(memory_space=pltpu.MemorySpace.SMEM)
    in_specs = (
        [smem_spec,
         pl.BlockSpec((bb, S), lambda i: (i, 0))]
        + [pl.BlockSpec(a.shape, lambda i: (0, 0)) for a in weight_args]
    )
    out_spec = pl.BlockSpec((bb, a_pad), lambda i: (i, 0))

    # Advisory cost estimate for the XLA scheduler.
    h1 = kparams["w1"].shape[1]
    h2 = kparams["w2"].shape[1]
    h3p = kparams["w3"].shape[1]
    flops = 2 * Bp * (S * h1 + h1 * h2 + h2 * h3p + h3p * a_pad)
    transcendentals = Bp * a_pad
    bytes_accessed = int(
        x.size * 4
        + sum(int(a.size) * a.dtype.itemsize for a in weight_args)
        + Bp * a_pad * 4)

    out_padded = pl.pallas_call(
        _actor_kernel,
        out_shape=jax.ShapeDtypeStruct((Bp, a_pad), jnp.float32),
        grid_spec=pltpu.PrefetchScalarGridSpec(
            num_scalar_prefetch=0,
            grid=(Bp // bb,),
            in_specs=in_specs,
            out_specs=out_spec,
        ),
        compiler_params=pltpu.CompilerParams(
            dimension_semantics=("parallel",),
        ),
        cost_estimate=pl.CostEstimate(
            flops=int(flops),
            transcendentals=int(transcendentals),
            bytes_accessed=bytes_accessed,
        ),
    )(ub, x, *weight_args)

    return out_padded[:B, :action_size]


# --------------------------------------------------------------------------
# Pure-JAX reference (f32) for validation
# --------------------------------------------------------------------------
def ddpg_actor_reference(state, params, upper_bound=1.0):
    h = jnp.maximum(state @ params["w1"] + params["b1"], 0.0)
    h = jnp.maximum(h @ params["w2"] + params["b2"], 0.0)
    h = jnp.maximum(h @ params["w3"] + params["b3"], 0.0)
    return jnp.tanh(h @ params["w4"] + params["b4"]) * upper_bound


if __name__ == "__main__":
    key = jax.random.PRNGKey(0)
    k_state, k_params = jax.random.split(key)

    batch = 8
    state_size = 33      # e.g. Reacher observation dim
    action_size = 4
    upper_bound = 1.0

    state = jax.random.normal(k_state, (batch, state_size), jnp.float32)
    params = init_ddpg_actor_params(k_params, state_size, action_size)
    kparams = prepare_params_for_kernel(params)

    actions = ddpg_actor_forward(state, kparams, upper_bound)
    actions = jax.block_until_ready(actions)

    # Sanity: shape, tanh-bounded range, and agreement with f32 reference
    # (bf16 matmul operands => loose tolerance).
    assert actions.shape == (batch, action_size)
    assert bool(jnp.all(jnp.abs(actions) <= upper_bound + 1e-6))
    ref = ddpg_actor_reference(state, params, upper_bound)
    assert bool(jnp.max(jnp.abs(actions - ref)) < 2e-2), \
        f"max diff {float(jnp.max(jnp.abs(actions - ref)))}"

    print("KERNEL_OK")
</pallas_src>

<mosaic_0001>
module attributes {stable_mosaic.version = 11 : i64} {
  func.func @_actor_kernel(%arg0: i32, %arg1: memref<1x1xf32, #tpu.memory_space<smem>>, %arg2: memref<8x33xf32, #tpu.memory_space<vmem>>, %arg3: memref<33x256xbf16, #tpu.memory_space<vmem>>, %arg4: memref<1x256xf32, #tpu.memory_space<vmem>>, %arg5: memref<256x128xbf16, #tpu.memory_space<vmem>>, %arg6: memref<1x128xf32, #tpu.memory_space<vmem>>, %arg7: memref<128x128xbf16, #tpu.memory_space<vmem>>, %arg8: memref<1x128xf32, #tpu.memory_space<vmem>>, %arg9: memref<128x128xbf16, #tpu.memory_space<vmem>>, %arg10: memref<1x128xf32, #tpu.memory_space<vmem>>, %arg11: memref<8x128xf32, #tpu.memory_space<vmem>>) attributes {dimension_semantics = [#tpu.dimension_semantics<parallel>], iteration_bounds = array<i64: 1>, scalar_prefetch = 0 : i64, scratch_operands = 0 : i64, tpu.core_type = #tpu.core_type<tc>, window_params = [{transform_indices = @transform_0, window_bounds = array<i64: 1, 1>}, {transform_indices = @transform_1, window_bounds = array<i64: 8, 33>}, {pipeline_mode = #tpu.pipeline_mode<synchronous>, transform_indices = @transform_2, window_bounds = array<i64: 33, 256>}, {pipeline_mode = #tpu.pipeline_mode<synchronous>, transform_indices = @transform_3, window_bounds = array<i64: 1, 256>}, {pipeline_mode = #tpu.pipeline_mode<synchronous>, transform_indices = @transform_4, window_bounds = array<i64: 256, 128>}, {pipeline_mode = #tpu.pipeline_mode<synchronous>, transform_indices = @transform_5, window_bounds = array<i64: 1, 128>}, {pipeline_mode = #tpu.pipeline_mode<synchronous>, transform_indices = @transform_6, window_bounds = array<i64: 128, 128>}, {pipeline_mode = #tpu.pipeline_mode<synchronous>, transform_indices = @transform_7, window_bounds = array<i64: 1, 128>}, {pipeline_mode = #tpu.pipeline_mode<synchronous>, transform_indices = @transform_8, window_bounds = array<i64: 128, 128>}, {pipeline_mode = #tpu.pipeline_mode<synchronous>, transform_indices = @transform_9, window_bounds = array<i64: 1, 128>}, {transform_indices = @transform_10, window_bounds = array<i64: 8, 128>}]} {
    %c0 = arith.constant 0 : index
    %c0_0 = arith.constant 0 : index
    %0 = memref.load %arg1[%c0, %c0_0] : memref<1x1xf32, #tpu.memory_space<smem>>
    %c0_1 = arith.constant 0 : index
    %c0_2 = arith.constant 0 : index
    %1 = vector.load %arg2[%c0_1, %c0_2] : memref<8x33xf32, #tpu.memory_space<vmem>>, vector<8x33xf32>
    %2 = arith.truncf %1 : vector<8x33xf32> to vector<8x33xbf16>
    %c0_3 = arith.constant 0 : index
    %c0_4 = arith.constant 0 : index
    %3 = vector.load %arg3[%c0_3, %c0_4] : memref<33x256xbf16, #tpu.memory_space<vmem>>, vector<33x256xbf16>
    %cst = arith.constant dense<0.000000e+00> : vector<8x256xf32>
    %4 = tpu.matmul %2, %3, %cst {dimension_numbers = #tpu.dot_dimension_numbers<[1], [0], [0], [1], [0, 0, 1, 1], [], []>} : vector<8x33xbf16>, vector<33x256xbf16>, vector<8x256xf32> -> vector<8x256xf32>
    %c0_5 = arith.constant 0 : index
    %c0_6 = arith.constant 0 : index
    %5 = vector.load %arg4[%c0_5, %c0_6] : memref<1x256xf32, #tpu.memory_space<vmem>>, vector<1x256xf32>
    %6 = vector.broadcast %5 : vector<1x256xf32> to vector<8x256xf32>
    %7 = arith.addf %4, %6 : vector<8x256xf32>
    %cst_7 = arith.constant 0.000000e+00 : f32
    %8 = vector.broadcast %cst_7 : f32 to vector<8x256xf32>
    %9 = arith.maximumf %7, %8 : vector<8x256xf32>
    %10 = arith.truncf %9 : vector<8x256xf32> to vector<8x256xbf16>
    %c0_8 = arith.constant 0 : index
    %c0_9 = arith.constant 0 : index
    %11 = vector.load %arg5[%c0_8, %c0_9] : memref<256x128xbf16, #tpu.memory_space<vmem>>, vector<256x128xbf16>
    %cst_10 = arith.constant dense<0.000000e+00> : vector<8x128xf32>
    %12 = tpu.matmul %10, %11, %cst_10 {dimension_numbers = #tpu.dot_dimension_numbers<[1], [0], [0], [1], [0, 0, 1, 1], [], []>} : vector<8x256xbf16>, vector<256x128xbf16>, vector<8x128xf32> -> vector<8x128xf32>
    %c0_11 = arith.constant 0 : index
    %c0_12 = arith.constant 0 : index
    %13 = vector.load %arg6[%c0_11, %c0_12] : memref<1x128xf32, #tpu.memory_space<vmem>>, vector<1x128xf32>
    %14 = vector.broadcast %13 : vector<1x128xf32> to vector<8x128xf32>
    %15 = arith.addf %12, %14 : vector<8x128xf32>
    %cst_13 = arith.constant 0.000000e+00 : f32
    %16 = vector.broadcast %cst_13 : f32 to vector<8x128xf32>
    %17 = arith.maximumf %15, %16 : vector<8x128xf32>
    %18 = arith.truncf %17 : vector<8x128xf32> to vector<8x128xbf16>
    %c0_14 = arith.constant 0 : index
    %c0_15 = arith.constant 0 : index
    %19 = vector.load %arg7[%c0_14, %c0_15] : memref<128x128xbf16, #tpu.memory_space<vmem>>, vector<128x128xbf16>
    %cst_16 = arith.constant dense<0.000000e+00> : vector<8x128xf32>
    %20 = tpu.matmul %18, %19, %cst_16 {dimension_numbers = #tpu.dot_dimension_numbers<[1], [0], [0], [1], [0, 0, 1, 1], [], []>} : vector<8x128xbf16>, vector<128x128xbf16>, vector<8x128xf32> -> vector<8x128xf32>
    %c0_17 = arith.constant 0 : index
    %c0_18 = arith.constant 0 : index
    %21 = vector.load %arg8[%c0_17, %c0_18] : memref<1x128xf32, #tpu.memory_space<vmem>>, vector<1x128xf32>
    %22 = vector.broadcast %21 : vector<1x128xf32> to vector<8x128xf32>
    %23 = arith.addf %20, %22 : vector<8x128xf32>
    %cst_19 = arith.constant 0.000000e+00 : f32
    %24 = vector.broadcast %cst_19 : f32 to vector<8x128xf32>
    %25 = arith.maximumf %23, %24 : vector<8x128xf32>
    %26 = arith.truncf %25 : vector<8x128xf32> to vector<8x128xbf16>
    %c0_20 = arith.constant 0 : index
    %c0_21 = arith.constant 0 : index
    %27 = vector.load %arg9[%c0_20, %c0_21] : memref<128x128xbf16, #tpu.memory_space<vmem>>, vector<128x128xbf16>
    %cst_22 = arith.constant dense<0.000000e+00> : vector<8x128xf32>
    %28 = tpu.matmul %26, %27, %cst_22 {dimension_numbers = #tpu.dot_dimension_numbers<[1], [0], [0], [1], [0, 0, 1, 1], [], []>} : vector<8x128xbf16>, vector<128x128xbf16>, vector<8x128xf32> -> vector<8x128xf32>
    %c0_23 = arith.constant 0 : index
    %c0_24 = arith.constant 0 : index
    %29 = vector.load %arg10[%c0_23, %c0_24] : memref<1x128xf32, #tpu.memory_space<vmem>>, vector<1x128xf32>
    %30 = vector.broadcast %29 : vector<1x128xf32> to vector<8x128xf32>
    %31 = arith.addf %28, %30 : vector<8x128xf32>
    %32 = math.tanh %31 : vector<8x128xf32>
    %33 = vector.broadcast %0 : f32 to vector<8x128xf32>
    %34 = arith.mulf %32, %33 : vector<8x128xf32>
    %c0_25 = arith.constant 0 : index
    %c0_26 = arith.constant 0 : index
    %35 = vector.load %arg11[%c0_25, %c0_26] : memref<8x128xf32, #tpu.memory_space<vmem>>, vector<8x128xf32>
    tpu.vector_store %arg11[%c0_25, %c0_26], %34 {strides = array<i32>} : memref<8x128xf32, #tpu.memory_space<vmem>>, vector<8x128xf32>,
    return
  }
  func.func @transform_0(%arg0: i32) -> (i32, i32) {
    %c0_i32 = arith.constant 0 : i32
    %c0_i32_0 = arith.constant 0 : i32
    %c0_i32_1 = arith.constant 0 : i32
    return %c0_i32, %c0_i32_0 : i32, i32
  }
  func.func @transform_1(%arg0: i32) -> (i32, i32) {
    %c0_i32 = arith.constant 0 : i32
    %c0_i32_0 = arith.constant 0 : i32
    return %arg0, %c0_i32 : i32, i32
  }
  func.func @transform_2(%arg0: i32) -> (i32, i32) {
    %c0_i32 = arith.constant 0 : i32
    %c0_i32_0 = arith.constant 0 : i32
    %c0_i32_1 = arith.constant 0 : i32
    return %c0_i32, %c0_i32_0 : i32, i32
  }
  func.func @transform_3(%arg0: i32) -> (i32, i32) {
    %c0_i32 = arith.constant 0 : i32
    %c0_i32_0 = arith.constant 0 : i32
    %c0_i32_1 = arith.constant 0 : i32
    return %c0_i32, %c0_i32_0 : i32, i32
  }
  func.func @transform_4(%arg0: i32) -> (i32, i32) {
    %c0_i32 = arith.constant 0 : i32
    %c0_i32_0 = arith.constant 0 : i32
    %c0_i32_1 = arith.constant 0 : i32
    return %c0_i32, %c0_i32_0 : i32, i32
  }
  func.func @transform_5(%arg0: i32) -> (i32, i32) {
    %c0_i32 = arith.constant 0 : i32
    %c0_i32_0 = arith.constant 0 : i32
    %c0_i32_1 = arith.constant 0 : i32
    return %c0_i32, %c0_i32_0 : i32, i32
  }
  func.func @transform_6(%arg0: i32) -> (i32, i32) {
    %c0_i32 = arith.constant 0 : i32
    %c0_i32_0 = arith.constant 0 : i32
    %c0_i32_1 = arith.constant 0 : i32
    return %c0_i32, %c0_i32_0 : i32, i32
  }
  func.func @transform_7(%arg0: i32) -> (i32, i32) {
    %c0_i32 = arith.constant 0 : i32
    %c0_i32_0 = arith.constant 0 : i32
    %c0_i32_1 = arith.constant 0 : i32
    return %c0_i32, %c0_i32_0 : i32, i32
  }
  func.func @transform_8(%arg0: i32) -> (i32, i32) {
    %c0_i32 = arith.constant 0 : i32
    %c0_i32_0 = arith.constant 0 : i32
    %c0_i32_1 = arith.constant 0 : i32
    return %c0_i32, %c0_i32_0 : i32, i32
  }
  func.func @transform_9(%arg0: i32) -> (i32, i32) {
    %c0_i32 = arith.constant 0 : i32
    %c0_i32_0 = arith.constant 0 : i32
    %c0_i32_1 = arith.constant 0 : i32
    return %c0_i32, %c0_i32_0 : i32, i32
  }
  func.func @transform_10(%arg0: i32) -> (i32, i32) {
    %c0_i32 = arith.constant 0 : i32
    %c0_i32_0 = arith.constant 0 : i32
    return %arg0, %c0_i32 : i32, i32
  }
}

</mosaic_0001>

<llo_original>
// kernel: tpu_custom_call.1
$region0: #{tpu_custom_call.1}
  #allocation0 [shape = 'u32[]', space=smem, size = 0x4, offset = 0x4, fixed_abs, tag = 'smem constant byte address 0x4 - core index']
  #allocation1 [shape = 'u32[72,128]{1,0:T(1,128)}', space=vmem, size = 0x9000, scoped, tag = 'internal scratch']
  #allocation2 [shape = 'f32[1,1]{1,0:T(1,128)S(6)}', space=smem, size = 0x200, scoped, tag = 'scoped memory for tpu_custom_call.1']
  %s0 = inlined_call_operand.<no memory space> [shape: f32[1,1], index: 0, kind: input, shape index: {}]
  %s1 = inlined_call_operand.hbm [shape: f32[8,33], index: 1, kind: input, shape index: {}]
  %s2 = inlined_call_operand.hbm [shape: bf16[33,256], index: 2, kind: input, shape index: {}]
  %s3 = inlined_call_operand.vmem [shape: f32[1,256], index: 3, kind: input, shape index: {}]
  %s4 = inlined_call_operand.hbm [shape: bf16[256,128], index: 4, kind: input, shape index: {}]
  %s5 = inlined_call_operand.vmem [shape: f32[1,128], index: 5, kind: input, shape index: {}]
  %s6 = inlined_call_operand.hbm [shape: bf16[128,128], index: 6, kind: input, shape index: {}]
  %s7 = inlined_call_operand.vmem [shape: f32[1,128], index: 7, kind: input, shape index: {}]
  %s8 = inlined_call_operand.hbm [shape: bf16[128,128], index: 8, kind: input, shape index: {}]
  %s9 = inlined_call_operand.vmem [shape: f32[1,128], index: 9, kind: input, shape index: {}]
  %s10 = inlined_call_operand.hbm [shape: f32[8,128], index: 10, kind: output, shape index: {}]
  %s11 = sld [smem:[#allocation0]]
  $region70: #{tpu_custom_call.1} parent=0
    _
  %s13 = ssub.s32 1, %s11
  %s14 = scalar_select 0, %s13, %s11
  %15 = sst [smem:[#allocation2]] %s0
  $region1: #{tpu_custom_call.1} parent=0
    #allocation3 [shape = 'u8[4096]{0}', space=vmem, size = 0x1000, scoped, tag = 'input window, operand 1, single buffered']
    #allocation4 [shape = 's32[1]{0}', space=sflag, size = 0x4, scoped, tag = 'scoped memory for tpu_custom_call.1']
    #allocation5 [shape = 's32[1]{0}', space=sflag, size = 0x4, scoped, tag = 'scoped memory for tpu_custom_call.1']
    #allocation6 [shape = 'u8[20480]{0}', space=vmem, size = 0x5000, scoped, tag = 'input window, operand 2, single buffered']
    #allocation7 [shape = 's32[1]{0}', space=sflag, size = 0x4, scoped, tag = 'scoped memory for tpu_custom_call.1']
    #allocation8 [shape = 'u8[65536]{0}', space=vmem, size = 0x10000, scoped, tag = 'input window, operand 4, single buffered']
    #allocation9 [shape = 'u8[32768]{0}', space=vmem, size = 0x8000, scoped, tag = 'input window, operand 6, single buffered']
    #allocation10 [shape = 's32[1]{0}', space=sflag, size = 0x4, scoped, tag = 'scoped memory for tpu_custom_call.1']
    #allocation11 [shape = 'u8[32768]{0}', space=vmem, size = 0x8000, scoped, tag = 'input window, operand 8, single buffered']
    #allocation12 [shape = 'u8[4096]{0}', space=vmem, size = 0x1000, scoped, tag = 'output window, operand 0, single buffered']
    %16 = vsyncpa [#allocation4], 0
    %17 = vsyncpa [#allocation7], 0
    %18 = vsyncpa [#allocation10], 0
    %19 = vsyncpa [#allocation5], 0
    // Predicated region
    $region2: #{tpu_custom_call.1} parent=1 // pred_check
      _
    $region3: #{tpu_custom_call.1} parent=1 // pred_check_branch
      %21 = sbr.rel (0) target = $region5
    $region4: #{tpu_custom_call.1} parent=1 // pred_region
      _
    $region5: #{tpu_custom_call.1} parent=1 // pred_fallthru
      _
    // Predicated region
    $region6: #{tpu_custom_call.1} parent=1 // pred_check
      _
    $region7: #{tpu_custom_call.1} parent=1 // pred_check_branch
      %23 = sbr.rel (0) target = $region9
    $region8: #{tpu_custom_call.1} parent=1 // pred_region
      %25 = vsyncadd [#allocation4], 0
      %s27 = sshll.u32 %s1, 4
      %s28 = int_to_ptr.hbm [resolvable:$true] %s27
      %s29 = sshll.u32 [#allocation3], 4
      %s30 = int_to_ptr.vmem [resolvable:$true] %s29
      %32 = dma.hbm_to_vmem [thread:$0]  %s28, 128, %s30, [#allocation4]
    $region9: #{tpu_custom_call.1} parent=1 // pred_fallthru
      _
    // Predicated region
    $region10: #{tpu_custom_call.1} parent=1 // pred_check
      _
    $region11: #{tpu_custom_call.1} parent=1 // pred_check_branch
      %34 = sbr.rel (0) target = $region13
    $region12: #{tpu_custom_call.1} parent=1 // pred_region
      %36 = vsyncadd [#allocation7], 0
      %s37 = sshll.u32 %s2, 4
      %s38 = int_to_ptr.hbm [resolvable:$true] %s37
      %s39 = sshll.u32 [#allocation6], 4
      %s40 = int_to_ptr.vmem [resolvable:$true] %s39
      %45 = dma.hbm_to_vmem [thread:$0]  %s38, 640, %s40, [#allocation7], 128, 128, 8
    $region13: #{tpu_custom_call.1} parent=1 // pred_fallthru
      _
    // Predicated region
    $region14: #{tpu_custom_call.1} parent=1 // pred_check
      _
    $region15: #{tpu_custom_call.1} parent=1 // pred_check_branch
      %47 = sbr.rel (0) target = $region17
    $region16: #{tpu_custom_call.1} parent=1 // pred_region
      _
    $region17: #{tpu_custom_call.1} parent=1 // pred_fallthru
      _
    // Predicated region
    $region18: #{tpu_custom_call.1} parent=1 // pred_check
      _
    $region19: #{tpu_custom_call.1} parent=1 // pred_check_branch
      %49 = sbr.rel (0) target = $region21
    $region20: #{tpu_custom_call.1} parent=1 // pred_region
      %51 = vsyncadd [#allocation7], 0
      %s52 = sshll.u32 %s4, 4
      %s53 = int_to_ptr.hbm [resolvable:$true] %s52
      %s54 = sshll.u32 [#allocation8], 4
      %s55 = int_to_ptr.vmem [resolvable:$true] %s54
      %60 = dma.hbm_to_vmem [thread:$0]  %s53, 2048, %s55, [#allocation7], 64, 64, 4
    $region21: #{tpu_custom_call.1} parent=1 // pred_fallthru
      _
    // Predicated region
    $region22: #{tpu_custom_call.1} parent=1 // pred_check
      _
    $region23: #{tpu_custom_call.1} parent=1 // pred_check_branch
      %62 = sbr.rel (0) target = $region25
    $region24: #{tpu_custom_call.1} parent=1 // pred_region
      _
    $region25: #{tpu_custom_call.1} parent=1 // pred_fallthru
      _
    // Predicated region
    $region26: #{tpu_custom_call.1} parent=1 // pred_check
      _
    $region27: #{tpu_custom_call.1} parent=1 // pred_check_branch
      %64 = sbr.rel (0) target = $region29
    $region28: #{tpu_custom_call.1} parent=1 // pred_region
      %66 = vsyncadd [#allocation10], 0
      %s67 = sshll.u32 %s6, 4
      %s68 = int_to_ptr.hbm [resolvable:$true] %s67
      %s69 = sshll.u32 [#allocation9], 4
      %s70 = int_to_ptr.vmem [resolvable:$true] %s69
      %75 = dma.hbm_to_vmem [thread:$0]  %s68, 1024, %s70, [#allocation10], 64, 64, 4
    $region29: #{tpu_custom_call.1} parent=1 // pred_fallthru
      _
    // Predicated region
    $region30: #{tpu_custom_call.1} parent=1 // pred_check
      _
    $region31: #{tpu_custom_call.1} parent=1 // pred_check_branch
      %77 = sbr.rel (0) target = $region33
    $region32: #{tpu_custom_call.1} parent=1 // pred_region
      _
    $region33: #{tpu_custom_call.1} parent=1 // pred_fallthru
      _
    // Predicated region
    $region34: #{tpu_custom_call.1} parent=1 // pred_check
      _
    $region35: #{tpu_custom_call.1} parent=1 // pred_check_branch
      %79 = sbr.rel (0) target = $region37
    $region36: #{tpu_custom_call.1} parent=1 // pred_region
      %81 = vsyncadd [#allocation10], 0
      %s82 = sshll.u32 %s8, 4
      %s83 = int_to_ptr.hbm [resolvable:$true] %s82
      %s84 = sshll.u32 [#allocation11], 4
      %s85 = int_to_ptr.vmem [resolvable:$true] %s84
      %90 = dma.hbm_to_vmem [thread:$0]  %s83, 1024, %s85, [#allocation10], 64, 64, 4
    $region37: #{tpu_custom_call.1} parent=1 // pred_fallthru
      _
    // Predicated region
    $region38: #{tpu_custom_call.1} parent=1 // pred_check
      _
    $region39: #{tpu_custom_call.1} parent=1 // pred_check_branch
      %92 = sbr.rel (0) target = $region41
    $region40: #{tpu_custom_call.1} parent=1 // pred_region
      _
    $region41: #{tpu_custom_call.1} parent=1 // pred_fallthru
      _
    // Predicated region
    $region42: #{tpu_custom_call.1} parent=1 // pred_check
      _
    $region43: #{tpu_custom_call.1} parent=1 // pred_check_branch
      %94 = sbr.rel (0) target = $region45
    $region44: #{tpu_custom_call.1} parent=1 // pred_region
      %96 = dma.done [#allocation4], 128
    $region45: #{tpu_custom_call.1} parent=1 // pred_fallthru
      _
    // Predicated region
    $region46: #{tpu_custom_call.1} parent=1 // pred_check
      _
    $region47: #{tpu_custom_call.1} parent=1 // pred_check_branch
      %98 = sbr.rel (0) target = $region49
    $region48: #{tpu_custom_call.1} parent=1 // pred_region
      %100 = dma.done [#allocation7], 640
    $region49: #{tpu_custom_call.1} parent=1 // pred_fallthru
      _
    // Predicated region
    $region50: #{tpu_custom_call.1} parent=1 // pred_check
      _
    $region51: #{tpu_custom_call.1} parent=1 // pred_check_branch
      %102 = sbr.rel (0) target = $region53
    $region52: #{tpu_custom_call.1} parent=1 // pred_region
      %104 = dma.done [#allocation7], 2048
    $region53: #{tpu_custom_call.1} parent=1 // pred_fallthru
      _
    // Predicated region
    $region54: #{tpu_custom_call.1} parent=1 // pred_check
      _
    $region55: #{tpu_custom_call.1} parent=1 // pred_check_branch
      %106 = sbr.rel (0) target = $region57
    $region56: #{tpu_custom_call.1} parent=1 // pred_region
      %108 = dma.done [#allocation10], 1024
    $region57: #{tpu_custom_call.1} parent=1 // pred_fallthru
      _
    // Predicated region
    $region58: #{tpu_custom_call.1} parent=1 // pred_check
      _
    $region59: #{tpu_custom_call.1} parent=1 // pred_check_branch
      %110 = sbr.rel (0) target = $region61
    $region60: #{tpu_custom_call.1} parent=1 // pred_region
      %112 = dma.done [#allocation10], 1024
    $region61: #{tpu_custom_call.1} parent=1 // pred_fallthru
      _
    %s114 = sld [smem:[#allocation2]]
    %v115 = vld [vmem:[#allocation3] sm:$0xff]
    %v116 = vpack.c.bf16 %v115, %v115
    %v117 = vld [vmem:[#allocation6] sm:$0xff]
    %v118 = vld [vmem:[#allocation6 + $0x8] sm:$0xff]
    %v119 = vld [vmem:[#allocation6 + $0x10] sm:$0xff]
    %v120 = vld [vmem:[#allocation6 + $0x18] sm:$0xff]
    %v121 = vld [vmem:[#allocation6 + $0x20] sm:$0x11]
    %v122 = vld [vmem:[%s3] sm:$0x3]
    %v124 = vperm.slane %v122, 0
    %v125 = vperm.slane %v122, 1
    %v133 = vunpack.c.l.b16 %v117
    %v134 = vunpack.c.h.b16 %v117
    %v135 = vunpack.c.l.b16 %v118
    %v136 = vunpack.c.h.b16 %v118
    %v137 = vunpack.c.l.b16 %v119
    %v138 = vunpack.c.h.b16 %v119
    %v139 = vunpack.c.l.b16 %v120
    %v140 = vunpack.c.h.b16 %v120
    %v141 = vunpack.c.l.b16 %v121
    %v142 = vunpack.c.h.b16 %v121
    %v143 = vpack.c.b16 %v135, %v133
    %v144 = vpack.c.b16 %v136, %v134
    %v145 = vpack.c.b16 %v139, %v137
    %v146 = vpack.c.b16 %v140, %v138
    %v147 = vpack.c.b16 %v141, %v141
    %v148 = vpack.c.b16 %v142, %v142
    %vm153 = vcmask 269312
    %v155 = vsel %vm153, %v116, 0
    %vm157 = vcmask 1040384
    %v158 = vsel 0, 4294967295, 65535
    %v159 = vsel %vm157, %v158, 0
    %v161 = vand.u32 %v147, %v159
    %v164 = vand.u32 %v148, %v159
    %166 = vmatpush.bf16.msra.mxu0 0
    %167 = vmatpush.bf16.msra.mxu0 0
    %168 = vmatpush.bf16.msra.mxu0 0
    %169 = vmatpush.bf16.msra.mxu0 0
    %170 = vmatpush.bf16.msra.mxu0 0
    %171 = vmatpush.bf16.msra.mxu0 %v161
    %172 = vmatpush.bf16.msra.mxu0 %v145
    %173 = vmatpush.bf16.msra.mxu0 %v143
    %174 = vmatmul.bf16.gmra.mxu0 %v155
    %v175 = vpop.f32.mrf.mxu0
    %v176 = vadd.f32 %v124, %v175
    %v177 = vpop.f32.mrf.mxu0
    %178 = vdwg.mxu0
    %179 = vmatpush.bf16.msra.mxu0 0
    %180 = vmatpush.bf16.msra.mxu0 0
    %181 = vmatpush.bf16.msra.mxu0 0
    %182 = vmatpush.bf16.msra.mxu0 0
    %183 = vmatpush.bf16.msra.mxu0 0
    %184 = vmatpush.bf16.msra.mxu0 %v164
    %185 = vmatpush.bf16.msra.mxu0 %v146
    %186 = vmatpush.bf16.msra.mxu0 %v144
    %187 = vmatmul.bf16.gmra.mxu0 %v155
    %v188 = vpop.f32.mrf.mxu0
    %v189 = vadd.f32 %v125, %v188
    %v190 = vpop.f32.mrf.mxu0
    %191 = vdwg.mxu0
    %v192 = vmax.f32 %v176, 0.0
    %v193 = vmax.f32 %v189, 0.0
    %v194 = vpack.c.bf16 %v192, %v192
    %v195 = vpack.c.bf16 %v193, %v193
    %v196 = vld [vmem:[#allocation8] sm:$0xf]
    %v197 = vld [vmem:[#allocation8 + $0x4] sm:$0xf]
    %v198 = vld [vmem:[#allocation8 + $0x8] sm:$0xf]
    %v199 = vld [vmem:[#allocation8 + $0xc] sm:$0xf]
    %v200 = vld [vmem:[#allocation8 + $0x10] sm:$0xf]
    %v201 = vld [vmem:[#allocation8 + $0x14] sm:$0xf]
    %v202 = vld [vmem:[#allocation8 + $0x18] sm:$0xf]
    %v203 = vld [vmem:[#allocation8 + $0x1c] sm:$0xf]
    %v204 = vld [vmem:[#allocation8 + $0x20] sm:$0xf]
    %v205 = vld [vmem:[#allocation8 + $0x24] sm:$0xf]
    %v206 = vld [vmem:[#allocation8 + $0x28] sm:$0xf]
    %v207 = vld [vmem:[#allocation8 + $0x2c] sm:$0xf]
    %v208 = vld [vmem:[#allocation8 + $0x30] sm:$0xf]
    %v209 = vld [vmem:[#allocation8 + $0x34] sm:$0xf]
    %v210 = vld [vmem:[#allocation8 + $0x38] sm:$0xf]
    %v211 = vld [vmem:[#allocation8 + $0x3c] sm:$0xf]
    %v212 = vld [vmem:[#allocation8 + $0x40] sm:$0xf]
    %v213 = vld [vmem:[#allocation8 + $0x44] sm:$0xf]
    %v214 = vld [vmem:[#allocation8 + $0x48] sm:$0xf]
    %v215 = vld [vmem:[#allocation8 + $0x4c] sm:$0xf]
    %v216 = vld [vmem:[#allocation8 + $0x50] sm:$0xf]
    %v217 = vld [vmem:[#allocation8 + $0x54] sm:$0xf]
    %v218 = vld [vmem:[#allocation8 + $0x58] sm:$0xf]
    %v219 = vld [vmem:[#allocation8 + $0x5c] sm:$0xf]
    %v220 = vld [vmem:[#allocation8 + $0x60] sm:$0xf]
    %v221 = vld [vmem:[#allocation8 + $0x64] sm:$0xf]
    %v222 = vld [vmem:[#allocation8 + $0x68] sm:$0xf]
    %v223 = vld [vmem:[#allocation8 + $0x6c] sm:$0xf]
    %v224 = vld [vmem:[#allocation8 + $0x70] sm:$0xf]
    %v225 = vld [vmem:[#allocation8 + $0x74] sm:$0xf]
    %v226 = vld [vmem:[#allocation8 + $0x78] sm:$0xf]
    %v227 = vld [vmem:[#allocation8 + $0x7c] sm:$0xf]
    %v228 = vld [vmem:[%s5] sm:$0x1]
    %v230 = vperm.slane %v228, 0
    %v264 = vunpack.c.l.b16 %v196
    %v265 = vunpack.c.l.b16 %v197
    %v266 = vunpack.c.l.b16 %v198
    %v267 = vunpack.c.l.b16 %v199
    %v268 = vunpack.c.l.b16 %v200
    %v269 = vunpack.c.l.b16 %v201
    %v270 = vunpack.c.l.b16 %v202
    %v271 = vunpack.c.l.b16 %v203
    %v272 = vunpack.c.l.b16 %v204
    %v273 = vunpack.c.l.b16 %v205
    %v274 = vunpack.c.l.b16 %v206
    %v275 = vunpack.c.l.b16 %v207
    %v276 = vunpack.c.l.b16 %v208
    %v277 = vunpack.c.l.b16 %v209
    %v278 = vunpack.c.l.b16 %v210
    %v279 = vunpack.c.l.b16 %v211
    %v280 = vunpack.c.l.b16 %v212
    %v281 = vunpack.c.l.b16 %v213
    %v282 = vunpack.c.l.b16 %v214
    %v283 = vunpack.c.l.b16 %v215
    %v284 = vunpack.c.l.b16 %v216
    %v285 = vunpack.c.l.b16 %v217
    %v286 = vunpack.c.l.b16 %v218
    %v287 = vunpack.c.l.b16 %v219
    %v288 = vunpack.c.l.b16 %v220
    %v289 = vunpack.c.l.b16 %v221
    %v290 = vunpack.c.l.b16 %v222
    %v291 = vunpack.c.l.b16 %v223
    %v292 = vunpack.c.l.b16 %v224
    %v293 = vunpack.c.l.b16 %v225
    %v294 = vunpack.c.l.b16 %v226
    %v295 = vunpack.c.l.b16 %v227
    %v296 = vpack.c.b16 %v265, %v264
    %v297 = vpack.c.b16 %v267, %v266
    %v298 = vpack.c.b16 %v269, %v268
    %v299 = vpack.c.b16 %v271, %v270
    %v300 = vpack.c.b16 %v273, %v272
    %v301 = vpack.c.b16 %v275, %v274
    %v302 = vpack.c.b16 %v277, %v276
    %v303 = vpack.c.b16 %v279, %v278
    %v304 = vpack.c.b16 %v281, %v280
    %v305 = vpack.c.b16 %v283, %v282
    %v306 = vpack.c.b16 %v285, %v284
    %v307 = vpack.c.b16 %v287, %v286
    %v308 = vpack.c.b16 %v289, %v288
    %v309 = vpack.c.b16 %v291, %v290
    %v310 = vpack.c.b16 %v293, %v292
    %v311 = vpack.c.b16 %v295, %v294
    %328 = vmatpush.bf16.msra.mxu0 %v303
    %329 = vmatpush.bf16.msra.mxu0 %v302
    %330 = vmatpush.bf16.msra.mxu0 %v301
    %331 = vmatpush.bf16.msra.mxu0 %v300
    %332 = vmatpush.bf16.msra.mxu0 %v299
    %333 = vmatpush.bf16.msra.mxu0 %v298
    %334 = vmatpush.bf16.msra.mxu0 %v297
    %335 = vmatpush.bf16.msra.mxu0 %v296
    %336 = vmatmul.bf16.gmra.mxu0 %v194
    %v337 = vpop.f32.mrf.mxu0
    %v338 = vadd.f32 %v230, %v337
    %v339 = vpop.f32.mrf.mxu0
    %340 = vdwg.mxu0
    %341 = vmatpush.bf16.msra.mxu0 %v311
    %342 = vmatpush.bf16.msra.mxu0 %v310
    %343 = vmatpush.bf16.msra.mxu0 %v309
    %344 = vmatpush.bf16.msra.mxu0 %v308
    %345 = vmatpush.bf16.msra.mxu0 %v307
    %346 = vmatpush.bf16.msra.mxu0 %v306
    %347 = vmatpush.bf16.msra.mxu0 %v305
    %348 = vmatpush.bf16.msra.mxu0 %v304
    %349 = vmatmul.bf16.gmra.mxu0 %v195
    %v350 = vpop.f32.mrf.mxu0
    %v351 = vadd.f32 %v338, %v350
    %v352 = vpop.f32.mrf.mxu0
    %353 = vdwg.mxu0
    %v354 = vmax.f32 %v351, 0.0
    %v355 = vpack.c.bf16 %v354, %v354
    %v356 = vld [vmem:[#allocation9] sm:$0xf]
    %v357 = vld [vmem:[#allocation9 + $0x4] sm:$0xf]
    %v358 = vld [vmem:[#allocation9 + $0x8] sm:$0xf]
    %v359 = vld [vmem:[#allocation9 + $0xc] sm:$0xf]
    %v360 = vld [vmem:[#allocation9 + $0x10] sm:$0xf]
    %v361 = vld [vmem:[#allocation9 + $0x14] sm:$0xf]
    %v362 = vld [vmem:[#allocation9 + $0x18] sm:$0xf]
    %v363 = vld [vmem:[#allocation9 + $0x1c] sm:$0xf]
    %v364 = vld [vmem:[#allocation9 + $0x20] sm:$0xf]
    %v365 = vld [vmem:[#allocation9 + $0x24] sm:$0xf]
    %v366 = vld [vmem:[#allocation9 + $0x28] sm:$0xf]
    %v367 = vld [vmem:[#allocation9 + $0x2c] sm:$0xf]
    %v368 = vld [vmem:[#allocation9 + $0x30] sm:$0xf]
    %v369 = vld [vmem:[#allocation9 + $0x34] sm:$0xf]
    %v370 = vld [vmem:[#allocation9 + $0x38] sm:$0xf]
    %v371 = vld [vmem:[#allocation9 + $0x3c] sm:$0xf]
    %v372 = vld [vmem:[%s7] sm:$0x1]
    %v374 = vperm.slane %v372, 0
    %v392 = vunpack.c.l.b16 %v356
    %v393 = vunpack.c.l.b16 %v357
    %v394 = vunpack.c.l.b16 %v358
    %v395 = vunpack.c.l.b16 %v359
    %v396 = vunpack.c.l.b16 %v360
    %v397 = vunpack.c.l.b16 %v361
    %v398 = vunpack.c.l.b16 %v362
    %v399 = vunpack.c.l.b16 %v363
    %v400 = vunpack.c.l.b16 %v364
    %v401 = vunpack.c.l.b16 %v365
    %v402 = vunpack.c.l.b16 %v366
    %v403 = vunpack.c.l.b16 %v367
    %v404 = vunpack.c.l.b16 %v368
    %v405 = vunpack.c.l.b16 %v369
    %v406 = vunpack.c.l.b16 %v370
    %v407 = vunpack.c.l.b16 %v371
    %v408 = vpack.c.b16 %v393, %v392
    %v409 = vpack.c.b16 %v395, %v394
    %v410 = vpack.c.b16 %v397, %v396
    %v411 = vpack.c.b16 %v399, %v398
    %v412 = vpack.c.b16 %v401, %v400
    %v413 = vpack.c.b16 %v403, %v402
    %v414 = vpack.c.b16 %v405, %v404
    %v415 = vpack.c.b16 %v407, %v406
    %424 = vmatpush.bf16.msra.mxu0 %v415
    %425 = vmatpush.bf16.msra.mxu0 %v414
    %426 = vmatpush.bf16.msra.mxu0 %v413
    %427 = vmatpush.bf16.msra.mxu0 %v412
    %428 = vmatpush.bf16.msra.mxu0 %v411
    %429 = vmatpush.bf16.msra.mxu0 %v410
    %430 = vmatpush.bf16.msra.mxu0 %v409
    %431 = vmatpush.bf16.msra.mxu0 %v408
    %432 = vmatmul.bf16.gmra.mxu0 %v355
    %v433 = vpop.f32.mrf.mxu0
    %v434 = vadd.f32 %v374, %v433
    %v435 = vpop.f32.mrf.mxu0
    %436 = vdwg.mxu0
    %v437 = vmax.f32 %v434, 0.0
    %v438 = vpack.c.bf16 %v437, %v437
    %v439 = vld [vmem:[#allocation11] sm:$0xf]
    %v440 = vld [vmem:[#allocation11 + $0x4] sm:$0xf]
    %v441 = vld [vmem:[#allocation11 + $0x8] sm:$0xf]
    %v442 = vld [vmem:[#allocation11 + $0xc] sm:$0xf]
    %v443 = vld [vmem:[#allocation11 + $0x10] sm:$0xf]
    %v444 = vld [vmem:[#allocation11 + $0x14] sm:$0xf]
    %v445 = vld [vmem:[#allocation11 + $0x18] sm:$0xf]
    %v446 = vld [vmem:[#allocation11 + $0x1c] sm:$0xf]
    %v447 = vld [vmem:[#allocation11 + $0x20] sm:$0xf]
    %v448 = vld [vmem:[#allocation11 + $0x24] sm:$0xf]
    %v449 = vld [vmem:[#allocation11 + $0x28] sm:$0xf]
    %v450 = vld [vmem:[#allocation11 + $0x2c] sm:$0xf]
    %v451 = vld [vmem:[#allocation11 + $0x30] sm:$0xf]
    %v452 = vld [vmem:[#allocation11 + $0x34] sm:$0xf]
    %v453 = vld [vmem:[#allocation11 + $0x38] sm:$0xf]
    %v454 = vld [vmem:[#allocation11 + $0x3c] sm:$0xf]
    %v455 = vld [vmem:[%s9] sm:$0x1]
    %v457 = vperm.slane %v455, 0
    %v475 = vunpack.c.l.b16 %v439
    %v476 = vunpack.c.l.b16 %v440
    %v477 = vunpack.c.l.b16 %v441
    %v478 = vunpack.c.l.b16 %v442
    %v479 = vunpack.c.l.b16 %v443
    %v480 = vunpack.c.l.b16 %v444
    %v481 = vunpack.c.l.b16 %v445
    %v482 = vunpack.c.l.b16 %v446
    %v483 = vunpack.c.l.b16 %v447
    %v484 = vunpack.c.l.b16 %v448
    %v485 = vunpack.c.l.b16 %v449
    %v486 = vunpack.c.l.b16 %v450
    %v487 = vunpack.c.l.b16 %v451
    %v488 = vunpack.c.l.b16 %v452
    %v489 = vunpack.c.l.b16 %v453
    %v490 = vunpack.c.l.b16 %v454
    %v491 = vpack.c.b16 %v476, %v475
    %v492 = vpack.c.b16 %v478, %v477
    %v493 = vpack.c.b16 %v480, %v479
    %v494 = vpack.c.b16 %v482, %v481
    %v495 = vpack.c.b16 %v484, %v483
    %v496 = vpack.c.b16 %v486, %v485
    %v497 = vpack.c.b16 %v488, %v487
    %v498 = vpack.c.b16 %v490, %v489
    %507 = vmatpush.bf16.msra.mxu0 %v498
    %508 = vmatpush.bf16.msra.mxu0 %v497
    %509 = vmatpush.bf16.msra.mxu0 %v496
    %510 = vmatpush.bf16.msra.mxu0 %v495
    %511 = vmatpush.bf16.msra.mxu0 %v494
    %512 = vmatpush.bf16.msra.mxu0 %v493
    %513 = vmatpush.bf16.msra.mxu0 %v492
    %514 = vmatpush.bf16.msra.mxu0 %v491
    %515 = vmatmul.bf16.gmra.mxu0 %v438
    %v516 = vpop.f32.mrf.mxu0
    %v517 = vadd.f32 %v457, %v516
    %v518 = vpop.f32.mrf.mxu0
    %519 = vdwg.mxu0
    %v520 = vtanh.pop %v517
    %v521 = vstv %s114
    %v522 = vmul.f32 %v520, %v521
    %523 = vst [vmem:[#allocation12] sm:$0xff] %v522
    // Predicated region
    $region62: #{tpu_custom_call.1} parent=1 // pred_check
      _
    $region63: #{tpu_custom_call.1} parent=1 // pred_check_branch
      %525 = sbr.rel (0) target = $region65
    $region64: #{tpu_custom_call.1} parent=1 // pred_region
      %527 = vsyncadd [#allocation5], 0
      %s529 = sshll.u32 [#allocation12], 4
      %s530 = int_to_ptr.vmem [resolvable:$true] %s529
      %s531 = sshll.u32 %s10, 4
      %s532 = int_to_ptr.hbm [resolvable:$true] %s531
      %534 = dma.vmem_to_hbm [thread:$0]  %s530, 128, %s532, [#allocation5]
    $region65: #{tpu_custom_call.1} parent=1 // pred_fallthru
      _
    // Predicated region
    $region66: #{tpu_custom_call.1} parent=1 // pred_check
      _
    $region67: #{tpu_custom_call.1} parent=1 // pred_check_branch
      %536 = sbr.rel (0) target = $region69
    $region68: #{tpu_custom_call.1} parent=1 // pred_region
      %538 = dma.done [#allocation5], 128
    $region69: #{tpu_custom_call.1} parent=1 // pred_fallthru
      _
    %539 = vsyncpa [#allocation4], 1
    %540 = vsyncpa [#allocation7], 1
    %541 = vsyncpa [#allocation10], 1
    %542 = vsyncpa [#allocation5], 1

</llo_original>
